<compile_context>
chip_gen: v6e
topology: v6e:2x2x1
jax: 0.10.0
libtpu: 0.0.40
codegen_flags: <defaults>
</compile_context>

<pallas_src>
import jax
import jax.numpy as jnp
import numpy as np
from jax.experimental import pallas as pl
from jax.experimental.pallas import tpu as pltpu


# ----------------------------- Pallas kernel ------------------------------ #
def edm_loss_kernel(coef_ref,                  # (B, 8) f32 in SMEM (scalar prefetch)
                    x_ref, noise_ref,          # (C, TN) bf16 tiles
                    w1_ref,                    # (HID, C) bf16
                    fb1_ref,                   # (HID, 1) f32  fused bias: b1 + c_noise*wt + bt
                    w2_ref,                    # (C, HID) bf16
                    b2_ref,                    # (C, 1) f32
                    out_ref):                  # (C, 1) f32 per-batch loss accumulator
    b = pl.program_id(0)
    j = pl.program_id(1)

    # Zero this batch's (tiny) accumulator at the start of its reduction loop.
    @pl.when(j == 0)
    def _():
        out_ref[...] = jnp.zeros_like(out_ref)

    # Per-batch EDM preconditioning constants (precomputed in the wrapper).
    sigma = coef_ref[b, 0]
    c_skip = coef_ref[b, 1]
    c_out = coef_ref[b, 2]
    c_in = coef_ref[b, 3]
    weight = coef_ref[b, 4]

    x01 = x_ref[...].astype(jnp.float32)        # clean image in [0,1], (C, TN)
    noise = noise_ref[...].astype(jnp.float32)  # (C, TN)

    x = x01 * 2.0 - 1.0                         # normalize_to_neg_one_to_one
    x_noised = x + noise * sigma

    # ---- synthetic nn_model: time-conditioned per-pixel (1x1-conv) MLP ----
    # bf16 MXU operands, f32 accumulation; time embedding is folded into fb1.
    xin = (c_in * x_noised).astype(jnp.bfloat16)                        # (C, TN)
    h = jnp.dot(w1_ref[...], xin, preferred_element_type=jnp.float32)   # (HID, TN) f32
    h = jnp.maximum(h + fb1_ref[...], 0.0).astype(jnp.bfloat16)         # (HID, TN) bf16
    F_x = jnp.dot(w2_ref[...], h, preferred_element_type=jnp.float32)   # (C, TN) f32
    F_x = F_x + b2_ref[...]

    # ---- EDM preconditioned denoiser + weighted squared error ----
    D_x = c_skip * x_noised + c_out * F_x
    diff = x - D_x
    # Lane-axis reduce (C, TN) -> (C, 1) in-kernel; `weight` applied to the
    # reduced value (per-batch scalar), not element-wise over the full tile.
    out_ref[...] += weight * jnp.sum(diff * diff, axis=1, keepdims=True)


# ------------------------------- wrapper ----------------------------------- #
def edm_loss(x_nchw, noise_nchw, rnd_normal, params,
             sigma_data=0.5, p_mean=-1.2, p_std=1.2,
             tile_n_cap=32768,                 # raise to 65536 on v5e/v6e (128 MiB VMEM)
             vmem_limit_bytes=48 * 1024 * 1024,  # <=48 MiB: safe on v7x's 64 MiB VMEM
             input_dtype=jnp.bfloat16):
    """Computes the EDM weighted-denoising training loss (a scalar)."""
    B, C, H, W = x_nchw.shape
    HW = H * W
    assert HW % 128 == 0, "H*W must be a multiple of 128 (lane width)"
    # Largest pixel tile that divides H*W, is a multiple of 128 and <= cap.
    tile_n = min(int(tile_n_cap) // 128 * 128, HW)
    while HW % tile_n != 0:
        tile_n -= 128
    n_tiles = HW // tile_n

    # NCHW -> (B, C, H*W): a pure reshape, channels in sublanes, pixels in lanes.
    x3 = x_nchw.reshape(B, C, HW).astype(input_dtype)
    n3 = noise_nchw.reshape(B, C, HW).astype(input_dtype)

    # Per-batch EDM constants (B values), packed into one SMEM-resident table.
    sd = jnp.float32(sigma_data)
    sigma = jnp.exp(rnd_normal.astype(jnp.float32) * p_std + p_mean)      # (B,)
    var = sigma * sigma + sd * sd
    inv_sqrt_var = jax.lax.rsqrt(var)
    c_noise = jnp.log(sigma) * 0.25                                       # (B,)
    zeros = jnp.zeros_like(sigma)
    coefs = jnp.stack(
        [sigma,
         (sd * sd) / var,                 # c_skip
         sigma * sd * inv_sqrt_var,       # c_out
         inv_sqrt_var,                    # c_in
         var / (sigma * sd) ** 2,         # weight
         zeros, zeros, zeros],
        axis=1).astype(jnp.float32)       # (B, 8)

    w1, b1, wt, bt, w2, b2 = params
    hid = w1.shape[1]
    # Column orientation: channels/hidden in sublanes, broadcast over pixel lanes.
    w1t = jnp.asarray(w1, jnp.float32).T.astype(jnp.bfloat16)    # (HID, C) bf16 (MXU operand)
    w2t = jnp.asarray(w2, jnp.float32).T.astype(jnp.bfloat16)    # (C, HID) bf16 (MXU operand)
    b2c = jnp.asarray(b2, jnp.float32).reshape(C, 1)             # (C, 1)
    # Fused first bias per batch: b1 + c_noise*wt + bt  -> (B, HID, 1) f32.
    fused_b1 = (jnp.asarray(b1, jnp.float32)
                + c_noise[:, None] * jnp.asarray(wt, jnp.float32)
                + jnp.asarray(bt, jnp.float32)).reshape(B, hid, 1)

    grid = (B, n_tiles)

    partial = pl.pallas_call(
        edm_loss_kernel,
        out_shape=jax.ShapeDtypeStruct((B, C, 1), jnp.float32),   # tiny per-batch sums
        grid_spec=pltpu.PrefetchScalarGridSpec(
            num_scalar_prefetch=1,                                # coefs -> SMEM
            grid=grid,
            in_specs=[
                pl.BlockSpec((None, C, tile_n), lambda b, j, c: (b, 0, j)),   # x
                pl.BlockSpec((None, C, tile_n), lambda b, j, c: (b, 0, j)),   # noise
                pl.BlockSpec((hid, C), lambda b, j, c: (0, 0)),               # W1^T (bf16)
                pl.BlockSpec((None, hid, 1), lambda b, j, c: (b, 0, 0)),      # fused b1
                pl.BlockSpec((C, hid), lambda b, j, c: (0, 0)),               # W2^T (bf16)
                pl.BlockSpec((C, 1), lambda b, j, c: (0, 0)),                 # b2
            ],
            out_specs=pl.BlockSpec((None, C, 1), lambda b, j, c: (b, 0, 0)),
        ),
        compiler_params=pltpu.CompilerParams(
            dimension_semantics=("parallel", "arbitrary"),   # batch parallel, pixel-tile reduce
            vmem_limit_bytes=vmem_limit_bytes),
    )(coefs, x3, n3, w1t, fused_b1, w2t, b2c)

    # partial[b, c, 0] = sum over pixels of weight_b * (x - D_x)^2  -> mean.
    return jnp.sum(partial) / jnp.float32(B * C * H * W)


# --------------------------- pure-JAX reference ----------------------------- #
def _synthetic_nn_model_ref(x_in, c_noise_flat, params):
    """Time-conditioned per-pixel (1x1-conv) MLP, mirroring the kernel's model."""
    w1, b1, wt, bt, w2, b2 = params
    B = x_in.shape[0]
    hp = jax.lax.Precision.HIGHEST
    temb = (c_noise_flat[:, None] * wt + bt).reshape(B, -1, 1, 1)
    h = jnp.einsum('bchw,cd->bdhw', x_in, w1, precision=hp) \
        + b1.reshape(1, -1, 1, 1) + temb
    h = jnp.maximum(h, 0.0)
    F_x = jnp.einsum('bdhw,dc->bchw', h, w2, precision=hp) + b2.reshape(1, -1, 1, 1)
    return F_x


def edm_loss_ref(x_nchw, noise_nchw, rnd_normal, params,
                 sigma_data=0.5, p_mean=-1.2, p_std=1.2, input_dtype=jnp.bfloat16):
    B = x_nchw.shape[0]
    x = x_nchw.astype(input_dtype).astype(jnp.float32) * 2.0 - 1.0
    noise = noise_nchw.astype(input_dtype).astype(jnp.float32)
    sigma = jnp.exp(rnd_normal.astype(jnp.float32) * p_std + p_mean).reshape(B, 1, 1, 1)
    x_noised = x + noise * sigma

    sd2 = sigma_data ** 2
    var = sigma ** 2 + sd2
    c_skip = sd2 / var
    c_out = sigma * sigma_data / jnp.sqrt(var)
    c_in = 1.0 / jnp.sqrt(var)
    c_noise = jnp.log(sigma) / 4.0

    F_x = _synthetic_nn_model_ref(c_in * x_noised, c_noise.reshape(B), params)
    D_x = c_skip * x_noised + c_out * F_x
    weight = var / (sigma * sigma_data) ** 2
    return jnp.mean(weight * (x - D_x) ** 2)


# ------------------------- deterministic parameters ------------------------ #
def init_params(key, channels, hidden):
    k1, k2, k3, k4 = jax.random.split(key, 4)
    w1 = jax.random.normal(k1, (channels, hidden), jnp.float32) * 0.2
    b1 = jnp.zeros((1, hidden), jnp.float32)
    wt = jax.random.normal(k2, (1, hidden), jnp.float32) * 0.2
    bt = jax.random.normal(k3, (1, hidden), jnp.float32) * 0.02
    w2 = jax.random.normal(k4, (hidden, channels), jnp.float32) * 0.2
    b2 = jnp.zeros((1, channels), jnp.float32)
    return (w1, b1, wt, bt, w2, b2)


# ----------------------------------- main ----------------------------------- #
if __name__ == "__main__":
    B, C, H, W = 2, 4, 16, 16        # B even -> both v7x TensorCores busy
    HIDDEN = 32

    key = jax.random.PRNGKey(0)
    kx, kn, ks, kp = jax.random.split(key, 4)

    x = jax.random.uniform(kx, (B, C, H, W), jnp.float32)       # clean image in [0,1]
    noise = jax.random.normal(kn, (B, C, H, W), jnp.float32)    # perturbation noise
    rnd_normal = jax.random.normal(ks, (B,), jnp.float32)       # log-sigma draw

    params = init_params(kp, C, HIDDEN)

    loss = edm_loss(x, noise, rnd_normal, params,
                    sigma_data=0.5, p_mean=-1.2, p_std=1.2)
    loss = jax.block_until_ready(loss)

    ref = jax.block_until_ready(
        edm_loss_ref(x, noise, rnd_normal, params,
                     sigma_data=0.5, p_mean=-1.2, p_std=1.2))

    assert np.isfinite(float(loss))
    np.testing.assert_allclose(float(loss), float(ref), rtol=2e-2, atol=1e-5)

    print("KERNEL_OK")
</pallas_src>

<mosaic_0001>
module attributes {stable_mosaic.version = 11 : i64} {
  func.func @edm_loss_kernel(%arg0: i32, %arg1: i32, %arg2: memref<2x8xf32, #tpu.memory_space<smem>>, %arg3: memref<1x4x256xbf16, #tpu.memory_space<vmem>>, %arg4: memref<1x4x256xbf16, #tpu.memory_space<vmem>>, %arg5: memref<32x4xbf16, #tpu.memory_space<vmem>>, %arg6: memref<1x32x1xf32, #tpu.memory_space<vmem>>, %arg7: memref<4x32xbf16, #tpu.memory_space<vmem>>, %arg8: memref<4x1xf32, #tpu.memory_space<vmem>>, %arg9: memref<1x4x1xf32, #tpu.memory_space<vmem>>) attributes {dimension_semantics = [#tpu.dimension_semantics<parallel>, #tpu.dimension_semantics<arbitrary>], iteration_bounds = array<i64: 2, 1>, scalar_prefetch = 1 : i64, scratch_operands = 0 : i64, tpu.core_type = #tpu.core_type<tc>, window_params = [{transform_indices = @transform_0, window_bounds = array<i64: 1, 4, 256>}, {transform_indices = @transform_1, window_bounds = array<i64: 1, 4, 256>}, {pipeline_mode = #tpu.pipeline_mode<synchronous>, transform_indices = @transform_2, window_bounds = array<i64: 32, 4>}, {transform_indices = @transform_3, window_bounds = array<i64: 1, 32, 1>}, {pipeline_mode = #tpu.pipeline_mode<synchronous>, transform_indices = @transform_4, window_bounds = array<i64: 4, 32>}, {pipeline_mode = #tpu.pipeline_mode<synchronous>, transform_indices = @transform_5, window_bounds = array<i64: 4, 1>}, {transform_indices = @transform_6, window_bounds = array<i64: 1, 4, 1>}]} {
    %c0_i32 = arith.constant 0 : i32
    %0 = arith.cmpi eq, %arg1, %c0_i32 : i32
    %1 = arith.extui %0 : i1 to i32
    %c0_i32_0 = arith.constant 0 : i32
    %2 = arith.cmpi ne, %1, %c0_i32_0 : i32
    scf.if %2 {
      %cst_27 = arith.constant 0.000000e+00 : f32
      %60 = vector.broadcast %cst_27 : f32 to vector<4x1xf32>
      %c0_28 = arith.constant 0 : index
      %c0_29 = arith.constant 0 : index
      %c0_30 = arith.constant 0 : index
      %61 = vector.load %arg9[%c0_28, %c0_29, %c0_30] : memref<1x4x1xf32, #tpu.memory_space<vmem>>, vector<1x4x1xf32>
      %62 = vector.shape_cast %61 : vector<1x4x1xf32> to vector<4x1xf32>
      %63 = vector.shape_cast %60 : vector<4x1xf32> to vector<1x4x1xf32>
      tpu.vector_store %arg9[%c0_28, %c0_29, %c0_30], %63 {strides = array<i32>} : memref<1x4x1xf32, #tpu.memory_space<vmem>>, vector<1x4x1xf32>,
    } else {
    }
    %3 = arith.index_cast %arg0 : i32 to index
    %c0 = arith.constant 0 : index
    %4 = memref.load %arg2[%3, %c0] : memref<2x8xf32, #tpu.memory_space<smem>>
    %5 = arith.index_cast %arg0 : i32 to index
    %c1 = arith.constant 1 : index
    %6 = memref.load %arg2[%5, %c1] : memref<2x8xf32, #tpu.memory_space<smem>>
    %7 = arith.index_cast %arg0 : i32 to index
    %c2 = arith.constant 2 : index
    %8 = memref.load %arg2[%7, %c2] : memref<2x8xf32, #tpu.memory_space<smem>>
    %9 = arith.index_cast %arg0 : i32 to index
    %c3 = arith.constant 3 : index
    %10 = memref.load %arg2[%9, %c3] : memref<2x8xf32, #tpu.memory_space<smem>>
    %11 = arith.index_cast %arg0 : i32 to index
    %c4 = arith.constant 4 : index
    %12 = memref.load %arg2[%11, %c4] : memref<2x8xf32, #tpu.memory_space<smem>>
    %c0_1 = arith.constant 0 : index
    %c0_2 = arith.constant 0 : index
    %c0_3 = arith.constant 0 : index
    %13 = vector.load %arg3[%c0_1, %c0_2, %c0_3] : memref<1x4x256xbf16, #tpu.memory_space<vmem>>, vector<1x4x256xbf16>
    %14 = vector.shape_cast %13 : vector<1x4x256xbf16> to vector<4x256xbf16>
    %15 = arith.extf %14 : vector<4x256xbf16> to vector<4x256xf32>
    %c0_4 = arith.constant 0 : index
    %c0_5 = arith.constant 0 : index
    %c0_6 = arith.constant 0 : index
    %16 = vector.load %arg4[%c0_4, %c0_5, %c0_6] : memref<1x4x256xbf16, #tpu.memory_space<vmem>>, vector<1x4x256xbf16>
    %17 = vector.shape_cast %16 : vector<1x4x256xbf16> to vector<4x256xbf16>
    %18 = arith.extf %17 : vector<4x256xbf16> to vector<4x256xf32>
    %cst = arith.constant 2.000000e+00 : f32
    %19 = vector.broadcast %cst : f32 to vector<4x256xf32>
    %20 = arith.mulf %15, %19 : vector<4x256xf32>
    %cst_7 = arith.constant 1.000000e+00 : f32
    %21 = vector.broadcast %cst_7 : f32 to vector<4x256xf32>
    %22 = arith.subf %20, %21 : vector<4x256xf32>
    %23 = vector.broadcast %4 : f32 to vector<4x256xf32>
    %24 = arith.mulf %18, %23 : vector<4x256xf32>
    %25 = arith.addf %22, %24 : vector<4x256xf32>
    %26 = vector.broadcast %10 : f32 to vector<4x256xf32>
    %27 = arith.mulf %26, %25 : vector<4x256xf32>
    %28 = arith.truncf %27 : vector<4x256xf32> to vector<4x256xbf16>
    %c0_8 = arith.constant 0 : index
    %c0_9 = arith.constant 0 : index
    %29 = vector.load %arg5[%c0_8, %c0_9] : memref<32x4xbf16, #tpu.memory_space<vmem>>, vector<32x4xbf16>
    %cst_10 = arith.constant dense<0.000000e+00> : vector<32x256xf32>
    %30 = tpu.matmul %29, %28, %cst_10 {dimension_numbers = #tpu.dot_dimension_numbers<[1], [0], [0], [1], [0, 0, 1, 1], [], []>} : vector<32x4xbf16>, vector<4x256xbf16>, vector<32x256xf32> -> vector<32x256xf32>
    %c0_11 = arith.constant 0 : index
    %c0_12 = arith.constant 0 : index
    %c0_13 = arith.constant 0 : index
    %31 = vector.load %arg6[%c0_11, %c0_12, %c0_13] : memref<1x32x1xf32, #tpu.memory_space<vmem>>, vector<1x32x1xf32>
    %32 = vector.shape_cast %31 : vector<1x32x1xf32> to vector<32x1xf32>
    %33 = vector.broadcast %32 : vector<32x1xf32> to vector<32x256xf32>
    %34 = arith.addf %30, %33 : vector<32x256xf32>
    %cst_14 = arith.constant 0.000000e+00 : f32
    %35 = vector.broadcast %cst_14 : f32 to vector<32x256xf32>
    %36 = arith.maximumf %34, %35 : vector<32x256xf32>
    %37 = arith.truncf %36 : vector<32x256xf32> to vector<32x256xbf16>
    %c0_15 = arith.constant 0 : index
    %c0_16 = arith.constant 0 : index
    %38 = vector.load %arg7[%c0_15, %c0_16] : memref<4x32xbf16, #tpu.memory_space<vmem>>, vector<4x32xbf16>
    %cst_17 = arith.constant dense<0.000000e+00> : vector<4x256xf32>
    %39 = tpu.matmul %38, %37, %cst_17 {dimension_numbers = #tpu.dot_dimension_numbers<[1], [0], [0], [1], [0, 0, 1, 1], [], []>} : vector<4x32xbf16>, vector<32x256xbf16>, vector<4x256xf32> -> vector<4x256xf32>
    %c0_18 = arith.constant 0 : index
    %c0_19 = arith.constant 0 : index
    %40 = vector.load %arg8[%c0_18, %c0_19] : memref<4x1xf32, #tpu.memory_space<vmem>>, vector<4x1xf32>
    %41 = vector.broadcast %40 : vector<4x1xf32> to vector<4x256xf32>
    %42 = arith.addf %39, %41 : vector<4x256xf32>
    %43 = vector.broadcast %6 : f32 to vector<4x256xf32>
    %44 = arith.mulf %43, %25 : vector<4x256xf32>
    %45 = vector.broadcast %8 : f32 to vector<4x256xf32>
    %46 = arith.mulf %45, %42 : vector<4x256xf32>
    %47 = arith.addf %44, %46 : vector<4x256xf32>
    %48 = arith.subf %22, %47 : vector<4x256xf32>
    %c0_20 = arith.constant 0 : index
    %c0_21 = arith.constant 0 : index
    %c0_22 = arith.constant 0 : index
    %49 = vector.load %arg9[%c0_20, %c0_21, %c0_22] : memref<1x4x1xf32, #tpu.memory_space<vmem>>, vector<1x4x1xf32>
    %50 = vector.shape_cast %49 : vector<1x4x1xf32> to vector<4x1xf32>
    %51 = arith.mulf %48, %48 : vector<4x256xf32>
    %cst_23 = arith.constant dense<0.000000e+00> : vector<4xf32>
    %52 = vector.multi_reduction <add>, %51, %cst_23 [1] : vector<4x256xf32> to vector<4xf32>
    %53 = vector.shape_cast %52 : vector<4xf32> to vector<4x1xf32>
    %54 = vector.broadcast %12 : f32 to vector<4x1xf32>
    %55 = arith.mulf %54, %53 : vector<4x1xf32>
    %56 = arith.addf %50, %55 : vector<4x1xf32>
    %c0_24 = arith.constant 0 : index
    %c0_25 = arith.constant 0 : index
    %c0_26 = arith.constant 0 : index
    %57 = vector.load %arg9[%c0_24, %c0_25, %c0_26] : memref<1x4x1xf32, #tpu.memory_space<vmem>>, vector<1x4x1xf32>
    %58 = vector.shape_cast %57 : vector<1x4x1xf32> to vector<4x1xf32>
    %59 = vector.shape_cast %56 : vector<4x1xf32> to vector<1x4x1xf32>
    tpu.vector_store %arg9[%c0_24, %c0_25, %c0_26], %59 {strides = array<i32>} : memref<1x4x1xf32, #tpu.memory_space<vmem>>, vector<1x4x1xf32>,
    return
  }
  func.func @transform_0(%arg0: i32, %arg1: i32, %arg2: memref<2x8xf32, #tpu.memory_space<smem>>) -> (i32, i32, i32) {
    %c0_i32 = arith.constant 0 : i32
    %c0_i32_0 = arith.constant 0 : i32
    return %arg0, %c0_i32, %arg1 : i32, i32, i32
  }
  func.func @transform_1(%arg0: i32, %arg1: i32, %arg2: memref<2x8xf32, #tpu.memory_space<smem>>) -> (i32, i32, i32) {
    %c0_i32 = arith.constant 0 : i32
    %c0_i32_0 = arith.constant 0 : i32
    return %arg0, %c0_i32, %arg1 : i32, i32, i32
  }
  func.func @transform_2(%arg0: i32, %arg1: i32, %arg2: memref<2x8xf32, #tpu.memory_space<smem>>) -> (i32, i32) {
    %c0_i32 = arith.constant 0 : i32
    %c0_i32_0 = arith.constant 0 : i32
    %c0_i32_1 = arith.constant 0 : i32
    return %c0_i32, %c0_i32_0 : i32, i32
  }
  func.func @transform_3(%arg0: i32, %arg1: i32, %arg2: memref<2x8xf32, #tpu.memory_space<smem>>) -> (i32, i32, i32) {
    %c0_i32 = arith.constant 0 : i32
    %c0_i32_0 = arith.constant 0 : i32
    %c0_i32_1 = arith.constant 0 : i32
    return %arg0, %c0_i32, %c0_i32_0 : i32, i32, i32
  }
  func.func @transform_4(%arg0: i32, %arg1: i32, %arg2: memref<2x8xf32, #tpu.memory_space<smem>>) -> (i32, i32) {
    %c0_i32 = arith.constant 0 : i32
    %c0_i32_0 = arith.constant 0 : i32
    %c0_i32_1 = arith.constant 0 : i32
    return %c0_i32, %c0_i32_0 : i32, i32
  }
  func.func @transform_5(%arg0: i32, %arg1: i32, %arg2: memref<2x8xf32, #tpu.memory_space<smem>>) -> (i32, i32) {
    %c0_i32 = arith.constant 0 : i32
    %c0_i32_0 = arith.constant 0 : i32
    %c0_i32_1 = arith.constant 0 : i32
    return %c0_i32, %c0_i32_0 : i32, i32
  }
  func.func @transform_6(%arg0: i32, %arg1: i32, %arg2: memref<2x8xf32, #tpu.memory_space<smem>>) -> (i32, i32, i32) {
    %c0_i32 = arith.constant 0 : i32
    %c0_i32_0 = arith.constant 0 : i32
    %c0_i32_1 = arith.constant 0 : i32
    return %arg0, %c0_i32, %c0_i32_0 : i32, i32, i32
  }
}

</mosaic_0001>

<llo_original>
// kernel: tpu_custom_call.1
$region0: #{tpu_custom_call.1}
  #allocation0 [shape = 'u32[]', space=smem, size = 0x4, offset = 0x4, fixed_abs, tag = 'smem constant byte address 0x4 - core index']
  #allocation1 [shape = 'u32[144,128]{1,0:T(1,128)}', space=vmem, size = 0x12000, scoped, tag = 'internal scratch']
  #allocation2 [shape = 's32[1]{0}', space=sflag, size = 0x4, scoped, tag = 'scoped memory for tpu_custom_call.1']
  #allocation3 [shape = 'u8[1024]{0}', space=smem, size = 0x400, scoped, tag = 'prefetched SMEM operand 0']
  %s0 = inlined_call_operand.vmem [shape: f32[2,8], index: 0, kind: input, shape index: {}]
  %s1 = inlined_call_operand.vmem [shape: bf16[2,4,256], index: 1, kind: input, shape index: {}]
  %s2 = inlined_call_operand.vmem [shape: bf16[2,4,256], index: 2, kind: input, shape index: {}]
  %s3 = inlined_call_operand.vmem [shape: bf16[32,4], index: 3, kind: input, shape index: {}]
  %s4 = inlined_call_operand.vmem [shape: f32[2,32,1], index: 4, kind: input, shape index: {}]
  %s5 = inlined_call_operand.vmem [shape: bf16[4,32], index: 5, kind: input, shape index: {}]
  %s6 = inlined_call_operand.vmem [shape: f32[4,1], index: 6, kind: input, shape index: {}]
  %s7 = inlined_call_operand.vmem [shape: f32[2,4,1], index: 7, kind: output, shape index: {}]
  %s8 = sld [smem:[#allocation0]]
  $region61: #{tpu_custom_call.1} parent=0
    _
  %s10 = ssub.s32 1, %s8
  %s11 = scalar_select 0, %s10, %s8
  %s12 = sshll.u32 %s0, 4
  %s13 = int_to_ptr.vmem [resolvable:$true] %s12
  %15 = dma.vmem_to_smem %s13, 32, [#allocation3], [#allocation2]
  %16 = dma.done [#allocation2], 32
  %17 = sfence
  loop: start=0, step=1, limit=4
  $region2: #{tpu_custom_call.1} parent=0 // loop_pre_header
    _
  $region3: #{tpu_custom_call.1} parent=0 // loop_header
    %s19 = sphi 0, %s23
    %p20 = scmp.ge.s32.totalorder %s19, 4
    %s26 = sphi 0, %s38
    %s27 = sphi 0, %s34
    %s28 = sphi 0, %s26
    %s29 = sphi 0, %s27
    %s30 = sphi 0, %s28
    %s31 = sphi 0, %s29
    %s43 = sphi 0, %s45
    %s46 = sphi 0, %s43
    %s47 = sphi 0, %s46
    %s63 = sphi 0, %s47
    %s71 = sphi 0, %s73
    %s74 = sphi 0, %s71
    %s75 = sphi 0, %s74
    %s91 = sphi 0, %s75
    %s95 = sphi 0, %s95
    %s97 = sphi 0, %s95
    %s98 = sphi 0, %s97
    %s112 = sphi 0, %s98
    %s118 = sphi 0, %s120
    %s121 = sphi 0, %s118
    %s122 = sphi 0, %s121
    %s138 = sphi 0, %s122
    %s142 = sphi 0, %s142
    %s144 = sphi 0, %s142
    %s145 = sphi 0, %s144
    %s159 = sphi 0, %s145
    %s163 = sphi 0, %s163
    %s165 = sphi 0, %s163
    %s166 = sphi 0, %s165
    %s180 = sphi 0, %s166
    %s186 = sphi 0, %s188
    %s189 = sphi 0, %s186
    %s190 = sphi 0, %s189
    %s206 = sphi 0, %s190
  $region4: #{tpu_custom_call.1} parent=0 // loop_header_branch
    %22 = sbr.rel (%p20) target = $region8
  $region5: #{tpu_custom_call.1} parent=0 // loop_body
    %s24 = ssub.s32 %s19, 1
    %s25 = ssub.s32 %s19, 2
    %s32 = sadd.s32 1, %s27
    %p33 = scmp.ge.s32.totalorder %s32, 1
    %s34 = scalar_select %p33, 0, %s32
    %s35 = sadd.s32 1, %s26
    %s36 = scalar_select %p33, %s35, %s26
    %p37 = scmp.ge.s32.totalorder %s36, 2
    %s38 = scalar_select %p37, 0, %s36
    %s39 = ssub.s32 %s26, %s38
    %s40 = ssub.s32 %s27, %s34
    %s41 = sor.u32 %s39, %s40
    %p42 = scmp.eq.s32.totalorder %s41, 0
    %s44 = sadd.s32 %s43, 1
    %s45 = scalar_select %p42, %s43, %s44
    %p48 = pneg %p42
    %p49 = scmp.eq.s32.totalorder %s19, 1
    %p50 = por %p48, %p49
    %p51 = scmp.ne.s32.totalorder %s43, %s46
    %p52 = scmp.eq.s32.totalorder %s19, 0
    %p53 = por %p51, %p52
    %p54 = scmp.ne.s32.totalorder %s43, %s46
    %p55 = scmp.eq.s32.totalorder %s24, 1
    %p56 = por %p54, %p55
    %p57 = scmp.ne.s32.totalorder %s46, %s47
    %p58 = scmp.eq.s32.totalorder %s24, 0
    %p59 = por %p57, %p58
    %p60 = scmp.ne.s32.totalorder %s46, %s47
    %p61 = scmp.eq.s32.totalorder %s25, 1
    %p62 = por %p60, %p61
    %p64 = scmp.ne.s32.totalorder %s47, %s63
    %p65 = scmp.eq.s32.totalorder %s25, 0
    %p66 = por %p64, %p65
    %s67 = ssub.s32 %s26, %s38
    %s68 = ssub.s32 %s27, %s34
    %s69 = sor.u32 %s67, %s68
    %p70 = scmp.eq.s32.totalorder %s69, 0
    %s72 = sadd.s32 %s71, 1
    %s73 = scalar_select %p70, %s71, %s72
    %p76 = pneg %p70
    %p77 = scmp.eq.s32.totalorder %s19, 1
    %p78 = por %p76, %p77
    %p79 = scmp.ne.s32.totalorder %s71, %s74
    %p80 = scmp.eq.s32.totalorder %s19, 0
    %p81 = por %p79, %p80
    %p82 = scmp.ne.s32.totalorder %s71, %s74
    %p83 = scmp.eq.s32.totalorder %s24, 1
    %p84 = por %p82, %p83
    %p85 = scmp.ne.s32.totalorder %s74, %s75
    %p86 = scmp.eq.s32.totalorder %s24, 0
    %p87 = por %p85, %p86
    %p88 = scmp.ne.s32.totalorder %s74, %s75
    %p89 = scmp.eq.s32.totalorder %s25, 1
    %p90 = por %p88, %p89
    %p92 = scmp.ne.s32.totalorder %s75, %s91
    %p93 = scmp.eq.s32.totalorder %s25, 0
    %p94 = por %p92, %p93
    %s96 = sadd.s32 %s95, 1
    %p99 = scmp.eq.s32.totalorder %s19, 1
    %p100 = scmp.ne.s32.totalorder %s95, %s97
    %p101 = scmp.eq.s32.totalorder %s19, 0
    %p102 = por %p100, %p101
    %p103 = scmp.ne.s32.totalorder %s95, %s97
    %p104 = scmp.eq.s32.totalorder %s24, 1
    %p105 = por %p103, %p104
    %p106 = scmp.ne.s32.totalorder %s97, %s98
    %p107 = scmp.eq.s32.totalorder %s24, 0
    %p108 = por %p106, %p107
    %p109 = scmp.ne.s32.totalorder %s97, %s98
    %p110 = scmp.eq.s32.totalorder %s25, 1
    %p111 = por %p109, %p110
    %p113 = scmp.ne.s32.totalorder %s98, %s112
    %p114 = scmp.eq.s32.totalorder %s25, 0
    %p115 = por %p113, %p114
    %s116 = ssub.s32 %s26, %s38
    %p117 = scmp.eq.s32.totalorder %s116, 0
    %s119 = sadd.s32 %s118, 1
    %s120 = scalar_select %p117, %s118, %s119
    %p123 = pneg %p117
    %p124 = scmp.eq.s32.totalorder %s19, 1
    %p125 = por %p123, %p124
    %p126 = scmp.ne.s32.totalorder %s118, %s121
    %p127 = scmp.eq.s32.totalorder %s19, 0
    %p128 = por %p126, %p127
    %p129 = scmp.ne.s32.totalorder %s118, %s121
    %p130 = scmp.eq.s32.totalorder %s24, 1
    %p131 = por %p129, %p130
    %p132 = scmp.ne.s32.totalorder %s121, %s122
    %p133 = scmp.eq.s32.totalorder %s24, 0
    %p134 = por %p132, %p133
    %p135 = scmp.ne.s32.totalorder %s121, %s122
    %p136 = scmp.eq.s32.totalorder %s25, 1
    %p137 = por %p135, %p136
    %p139 = scmp.ne.s32.totalorder %s122, %s138
    %p140 = scmp.eq.s32.totalorder %s25, 0
    %p141 = por %p139, %p140
    %s143 = sadd.s32 %s142, 1
    %p146 = scmp.eq.s32.totalorder %s19, 1
    %p147 = scmp.ne.s32.totalorder %s142, %s144
    %p148 = scmp.eq.s32.totalorder %s19, 0
    %p149 = por %p147, %p148
    %p150 = scmp.ne.s32.totalorder %s142, %s144
    %p151 = scmp.eq.s32.totalorder %s24, 1
    %p152 = por %p150, %p151
    %p153 = scmp.ne.s32.totalorder %s144, %s145
    %p154 = scmp.eq.s32.totalorder %s24, 0
    %p155 = por %p153, %p154
    %p156 = scmp.ne.s32.totalorder %s144, %s145
    %p157 = scmp.eq.s32.totalorder %s25, 1
    %p158 = por %p156, %p157
    %p160 = scmp.ne.s32.totalorder %s145, %s159
    %p161 = scmp.eq.s32.totalorder %s25, 0
    %p162 = por %p160, %p161
    %s164 = sadd.s32 %s163, 1
    %p167 = scmp.eq.s32.totalorder %s19, 1
    %p168 = scmp.ne.s32.totalorder %s163, %s165
    %p169 = scmp.eq.s32.totalorder %s19, 0
    %p170 = por %p168, %p169
    %p171 = scmp.ne.s32.totalorder %s163, %s165
    %p172 = scmp.eq.s32.totalorder %s24, 1
    %p173 = por %p171, %p172
    %p174 = scmp.ne.s32.totalorder %s165, %s166
    %p175 = scmp.eq.s32.totalorder %s24, 0
    %p176 = por %p174, %p175
    %p177 = scmp.ne.s32.totalorder %s165, %s166
    %p178 = scmp.eq.s32.totalorder %s25, 1
    %p179 = por %p177, %p178
    %p181 = scmp.ne.s32.totalorder %s166, %s180
    %p182 = scmp.eq.s32.totalorder %s25, 0
    %p183 = por %p181, %p182
    %s184 = ssub.s32 %s26, %s38
    %p185 = scmp.eq.s32.totalorder %s184, 0
    %s187 = sadd.s32 %s186, 1
    %s188 = scalar_select %p185, %s186, %s187
    %p191 = pneg %p185
    %p192 = scmp.eq.s32.totalorder %s19, 1
    %p193 = por %p191, %p192
    %p194 = scmp.ne.s32.totalorder %s186, %s189
    %p195 = scmp.eq.s32.totalorder %s19, 0
    %p196 = por %p194, %p195
    %p197 = scmp.ne.s32.totalorder %s186, %s189
    %p198 = scmp.eq.s32.totalorder %s24, 1
    %p199 = por %p197, %p198
    %p200 = scmp.ne.s32.totalorder %s189, %s190
    %p201 = scmp.eq.s32.totalorder %s24, 0
    %p202 = por %p200, %p201
    %p203 = scmp.ne.s32.totalorder %s189, %s190
    %p204 = scmp.eq.s32.totalorder %s25, 1
    %p205 = por %p203, %p204
    %p207 = scmp.ne.s32.totalorder %s190, %s206
    %p208 = scmp.eq.s32.totalorder %s25, 0
    %p209 = por %p207, %p208
    %p210 = scmp.le.s32.totalorder 1, %s19
    %p211 = scmp.lt.s32.totalorder %s19, 3
    %p212 = pnand %p210, %p211
    %p213 = pneg %p212
    // Predicated region
    $region9: #{tpu_custom_call.1} parent=5 // pred_check
      _
    $region10: #{tpu_custom_call.1} parent=5 // pred_check_branch
      %215 = sbr.rel (%p212) target = $region12
    $region11: #{tpu_custom_call.1} parent=5 // pred_region
      %s216 = ssub.s32 %s19, 1
      // Predicated region
      $region13: #{tpu_custom_call.1} parent=11 // pred_check
        %p217 = pneg %p108
      $region14: #{tpu_custom_call.1} parent=11 // pred_check_branch
        %219 = sbr.rel (%p217) target = $region16
      $region15: #{tpu_custom_call.1} parent=11 // pred_region
        _
      $region16: #{tpu_custom_call.1} parent=11 // pred_fallthru
        _
      // Predicated region
      $region17: #{tpu_custom_call.1} parent=11 // pred_check
        %p220 = pneg %p155
      $region18: #{tpu_custom_call.1} parent=11 // pred_check_branch
        %222 = sbr.rel (%p220) target = $region20
      $region19: #{tpu_custom_call.1} parent=11 // pred_region
        _
      $region20: #{tpu_custom_call.1} parent=11 // pred_fallthru
        _
      // Predicated region
      $region21: #{tpu_custom_call.1} parent=11 // pred_check
        %p223 = pneg %p176
      $region22: #{tpu_custom_call.1} parent=11 // pred_check_branch
        %225 = sbr.rel (%p223) target = $region24
      $region23: #{tpu_custom_call.1} parent=11 // pred_region
        _
      $region24: #{tpu_custom_call.1} parent=11 // pred_fallthru
        _
    $region12: #{tpu_custom_call.1} parent=5 // pred_fallthru
      _
    %p226 = scmp.lt.s32.totalorder %s19, 2
    // Predicated region
    $region25: #{tpu_custom_call.1} parent=5 // pred_check
      %p227 = pneg %p226
    $region26: #{tpu_custom_call.1} parent=5 // pred_check_branch
      %229 = sbr.rel (%p227) target = $region28
    $region27: #{tpu_custom_call.1} parent=5 // pred_region
      // Predicated region
      $region29: #{tpu_custom_call.1} parent=27 // pred_check
        %p230 = pneg %p53
      $region30: #{tpu_custom_call.1} parent=27 // pred_check_branch
        %232 = sbr.rel (%p230) target = $region32
      $region31: #{tpu_custom_call.1} parent=27 // pred_region
        %s233 = smul.u32 2, %s27
        %p234 = scmp.lt.s32.totalorder %s26, 1
        %s235 = scalar_select %p234, %s26, 1
        %p236 = scmp.lt.s32.totalorder %s233, 1
        %s237 = scalar_select %p236, %s233, 1
        %s238 = smul.addr %s235, 2
        %s239 = sadd.s32 %s237, %s238
        %s240 = smul.addr %s239, 2
        %s241 = scalar_lea.vmem %s1, %s240
        %s242 = smul.u32 2, %s27
      $region32: #{tpu_custom_call.1} parent=27 // pred_fallthru
        _
      // Predicated region
      $region33: #{tpu_custom_call.1} parent=27 // pred_check
        %p243 = pneg %p81
      $region34: #{tpu_custom_call.1} parent=27 // pred_check_branch
        %245 = sbr.rel (%p243) target = $region36
      $region35: #{tpu_custom_call.1} parent=27 // pred_region
        %s246 = smul.u32 2, %s27
        %p247 = scmp.lt.s32.totalorder %s26, 1
        %s248 = scalar_select %p247, %s26, 1
        %p249 = scmp.lt.s32.totalorder %s246, 1
        %s250 = scalar_select %p249, %s246, 1
        %s251 = smul.addr %s248, 2
        %s252 = sadd.s32 %s250, %s251
        %s253 = smul.addr %s252, 2
        %s254 = scalar_lea.vmem %s2, %s253
        %s255 = smul.u32 2, %s27
      $region36: #{tpu_custom_call.1} parent=27 // pred_fallthru
        _
      // Predicated region
      $region37: #{tpu_custom_call.1} parent=27 // pred_check
        %p256 = pneg %p128
      $region38: #{tpu_custom_call.1} parent=27 // pred_check_branch
        %258 = sbr.rel (%p256) target = $region40
      $region39: #{tpu_custom_call.1} parent=27 // pred_region
        %p259 = scmp.lt.s32.totalorder %s26, 1
        %s260 = scalar_select %p259, %s26, 1
        %s261 = smul.addr %s260, 4
        %s262 = smul.addr %s261, 8
        %s263 = scalar_lea.vmem %s4, %s262
      $region40: #{tpu_custom_call.1} parent=27 // pred_fallthru
        _
    $region28: #{tpu_custom_call.1} parent=5 // pred_fallthru
      _
    %p264 = scmp.le.s32.totalorder 1, %s19
    %p265 = scmp.lt.s32.totalorder %s19, 3
    %p266 = pnand %p264, %p265
    %p267 = pneg %p266
    // Predicated region
    $region41: #{tpu_custom_call.1} parent=5 // pred_check
      _
    $region42: #{tpu_custom_call.1} parent=5 // pred_check_branch
      %269 = sbr.rel (%p266) target = $region44
    $region43: #{tpu_custom_call.1} parent=5 // pred_region
      %s270 = ssub.s32 %s19, 1
      %s271 = smul.u32 2, %s29
      %p272 = scmp.lt.s32.totalorder %s28, 1
      %s273 = scalar_select %p272, %s28, 1
      %p274 = scmp.lt.s32.totalorder %s271, 1
      %s275 = scalar_select %p274, %s271, 1
      %s276 = smul.addr %s273, 2
      %s277 = sadd.s32 %s275, %s276
      %s278 = smul.addr %s277, 2
      %s279 = scalar_lea.vmem %s1, %s278
      %p280 = pneg %p59
      %p281 = pneg %p56
      %s282 = smul.u32 2, %s29
      %p283 = scmp.lt.s32.totalorder %s28, 1
      %s284 = scalar_select %p283, %s28, 1
      %p285 = scmp.lt.s32.totalorder %s282, 1
      %s286 = scalar_select %p285, %s282, 1
      %s287 = smul.addr %s284, 2
      %s288 = sadd.s32 %s286, %s287
      %s289 = smul.addr %s288, 2
      %s290 = scalar_lea.vmem %s2, %s289
      %p291 = pneg %p87
      %p292 = pneg %p84
      %p293 = pneg %p108
      %p294 = pneg %p105
      %p295 = scmp.lt.s32.totalorder %s28, 1
      %s296 = scalar_select %p295, %s28, 1
      %s297 = smul.addr %s296, 4
      %s298 = smul.addr %s297, 8
      %s299 = scalar_lea.vmem %s4, %s298
      %p300 = pneg %p134
      %p301 = pneg %p131
      %p302 = pneg %p155
      %p303 = pneg %p152
      %p304 = pneg %p176
      %p305 = pneg %p173
      %p306 = pneg %p202
      %p307 = pneg %p199
      %p308 = scmp.lt.s32.totalorder %s28, 1
      %s309 = scalar_select %p308, %s28, 1
      %s310 = smul.addr %s309, 4
      %s311 = scalar_lea.vmem %s7, %s310
      %s312 = smul.u32 2, %s29
      %p313 = scmp.lt.s32.totalorder %s28, 1
      %s314 = scalar_select %p313, %s28, 1
      %p315 = scmp.lt.s32.totalorder %s312, 1
      %s316 = scalar_select %p315, %s312, 1
      %s317 = smul.addr %s314, 2
      %s318 = sadd.s32 %s316, %s317
      %s319 = smul.addr %s318, 2
      %s320 = scalar_lea.vmem %s1, %s319
      %s321 = smul.u32 2, %s29
      %s322 = smul.u32 2, %s29
      %p323 = scmp.lt.s32.totalorder %s28, 1
      %s324 = scalar_select %p323, %s28, 1
      %p325 = scmp.lt.s32.totalorder %s322, 1
      %s326 = scalar_select %p325, %s322, 1
      %s327 = smul.addr %s324, 2
      %s328 = sadd.s32 %s326, %s327
      %s329 = smul.addr %s328, 2
      %s330 = scalar_lea.vmem %s2, %s329
      %s331 = smul.u32 2, %s29
      %p332 = scmp.lt.s32.totalorder %s28, 1
      %s333 = scalar_select %p332, %s28, 1
      %s334 = smul.addr %s333, 4
      %s335 = smul.addr %s334, 8
      %s336 = scalar_lea.vmem %s4, %s335
      %p337 = scmp.lt.s32.totalorder %s28, 1
      %s338 = scalar_select %p337, %s28, 1
      %s339 = smul.addr %s338, 4
      %s340 = scalar_lea.vmem %s7, %s339
      %p342 = scmp.eq.s32.totalorder %s29, 0
      // Predicated region
      $region45: #{tpu_custom_call.1} parent=43 // pred_check
        %p343 = pneg %p342
      $region46: #{tpu_custom_call.1} parent=43 // pred_check_branch
        %345 = sbr.rel (%p343) target = $region48
      $region47: #{tpu_custom_call.1} parent=43 // pred_region
        %vm346 = vcmask 3072
        %347 = vst.msk [vmem:[%s340] sm:$0xf] %vm346, 0.0
      $region48: #{tpu_custom_call.1} parent=43 // pred_fallthru
        _
      %s348 = smul.u32 %s28, 128
      %s349 = sld [smem:[#allocation3 + %s348]]
      %s350 = sadd.s32 %s348, 1
      %s351 = sld [smem:[#allocation3 + %s350]]
      %s352 = sadd.s32 %s348, 2
      %s353 = sld [smem:[#allocation3 + %s352]]
      %s354 = sadd.s32 %s348, 3
      %s355 = sld [smem:[#allocation3 + %s354]]
      %s356 = sadd.s32 %s348, 4
      %s357 = sld [smem:[#allocation3 + %s356]]
      %v358 = vld [vmem:[%s320] sm:$0xf]
      %v359 = vunpack.c.l.bf16 %v358
      %v360 = vld [vmem:[%s330] sm:$0xf]
      %v361 = vunpack.c.l.bf16 %v360
      %v362 = vmul.f32 %v359, 2.0
      %v363 = vsub.f32 %v362, 1.0
      %v364 = vstv %s349
      %v365 = vmul.f32 %v361, %v364
      %v366 = vadd.f32 %v363, %v365
      %v367 = vstv %s355
      %v368 = vmul.f32 %v367, %v366
      %v370 = vcombine.high %v368, %v368
      %v372 = vpack.c.bf16 %v368, %v368
      %v373 = vpack.c.bf16 %v370, %v370
      %v374 = vld [vmem:[%s3] sm:$0xf]
      %v375 = vld [vmem:[%s3 + $0x4] sm:$0xf]
      %v376 = vld [vmem:[%s3 + $0x8] sm:$0xf]
      %v377 = vld [vmem:[%s3 + $0xc] sm:$0xf]
      %v378 = vld [vmem:[%s336] sm:$0xff]
      %v379 = vld [vmem:[%s336 + $0x8] sm:$0xff]
      %v380 = vld [vmem:[%s336 + $0x10] sm:$0xff]
      %v381 = vld [vmem:[%s336 + $0x18] sm:$0xff]
      %383 = vset.pattern.permute.xlu0 0
      %384 = vperm.xlu0 %383, %v378
      %v385 = vpop.permute.xlu0 %384
      %388 = vset.pattern.permute.xlu0 0
      %389 = vperm.xlu0 %388, %v379
      %v390 = vpop.permute.xlu0 %389
      %393 = vset.pattern.permute.xlu0 0
      %394 = vperm.xlu0 %393, %v380
      %v395 = vpop.permute.xlu0 %394
      %398 = vset.pattern.permute.xlu0 0
      %399 = vperm.xlu0 %398, %v381
      %v400 = vpop.permute.xlu0 %399
      %v406 = vunpack.c.l.b16 %v374
      %v407 = vunpack.c.l.b16 %v375
      %v408 = vunpack.c.l.b16 %v376
      %v409 = vunpack.c.l.b16 %v377
      %v410 = vpack.c.b16 %v407, %v406
      %v411 = vpack.c.b16 %v409, %v408
      %vm412 = vcmask 31744
      %v414 = vsel %vm412, %v410, 0
      %v417 = vsel %vm412, %v411, 0
      %vm419 = vcmask 1041408
      %v421 = vsel %vm419, %v372, 0
      %v424 = vsel %vm419, %v373, 0
      %426 = vmatprep.subr.bf16.mxu0 0
      %427 = vmatpush1.bf16.msra.mxu0 0
      %428 = vmatprep.subr.bf16.mxu0 0
      %429 = vmatpush1.bf16.msra.mxu0 0
      %430 = vmatprep.subr.bf16.mxu0 0
      %431 = vmatpush1.bf16.msra.mxu0 0
      %432 = vmatprep.subr.bf16.mxu0 0
      %433 = vmatpush1.bf16.msra.mxu0 0
      %434 = vmatprep.subr.bf16.mxu0 0
      %435 = vmatpush1.bf16.msra.mxu0 0
      %436 = vmatprep.subr.bf16.mxu0 0
      %437 = vmatpush1.bf16.msra.mxu0 0
      %438 = vmatprep.subr.bf16.mxu0 0
      %439 = vmatpush1.bf16.msra.mxu0 0
      %440 = vmatprep.subr.bf16.mxu0 %v424
      %441 = vmatpush1.bf16.msra.mxu0 %v421
      %442 = vmatprep.subr.bf16.mxu0 0
      %443 = vmatpush2.bf16.msra.mxu0 0
      %444 = vmatprep.subr.bf16.mxu0 0
      %445 = vmatpush2.bf16.msra.mxu0 0
      %446 = vmatprep.subr.bf16.mxu0 0
      %447 = vmatpush2.bf16.msra.mxu0 0
      %448 = vmatprep.subr.bf16.mxu0 0
      %449 = vmatpush2.bf16.msra.mxu0 0
      %450 = vmatprep.subr.bf16.mxu0 0
      %451 = vmatpush2.bf16.msra.mxu0 0
      %452 = vmatprep.subr.bf16.mxu0 0
      %453 = vmatpush2.bf16.msra.mxu0 0
      %454 = vmatprep.subr.bf16.mxu0 0
      %455 = vmatpush2.bf16.msra.mxu0 0
      %456 = vmatprep.subr.bf16.mxu0 0
      %457 = vmatpush2.bf16.msra.mxu0 0
      %458 = vmatprep.mubr.bf16.mxu0 0
      %459 = vmatmul.mubr.bf16.gmra.mxu0 %v414
      %v460 = vpop.f32.mrf.mxu0
      %v461 = vadd.f32 %v385, %v460
      %v462 = vpop.f32.mrf.mxu0
      %v463 = vadd.f32 %v385, %v462
      %v464 = vpop.f32.mrf.mxu0
      %v465 = vadd.f32 %v390, %v464
      %v466 = vpop.f32.mrf.mxu0
      %v467 = vadd.f32 %v390, %v466
      %468 = vmatprep.mubr.bf16.mxu0 0
      %469 = vmatmul.mubr.bf16.gmra.mxu0 %v417
      %v470 = vpop.f32.mrf.mxu0
      %v471 = vadd.f32 %v395, %v470
      %v472 = vpop.f32.mrf.mxu0
      %v473 = vadd.f32 %v395, %v472
      %v474 = vpop.f32.mrf.mxu0
      %v475 = vadd.f32 %v400, %v474
      %v476 = vpop.f32.mrf.mxu0
      %v477 = vadd.f32 %v400, %v476
      %478 = vdwg.mxu0
      %v479 = vmax.f32 %v461, 0.0
      %v480 = vmax.f32 %v463, 0.0
      %v481 = vmax.f32 %v465, 0.0
      %v482 = vmax.f32 %v467, 0.0
      %v483 = vmax.f32 %v471, 0.0
      %v484 = vmax.f32 %v473, 0.0
      %v485 = vmax.f32 %v475, 0.0
      %v486 = vmax.f32 %v477, 0.0
      %v487 = vpack.c.bf16 %v481, %v479
      %v488 = vpack.c.bf16 %v482, %v480
      %v489 = vpack.c.bf16 %v485, %v483
      %v490 = vpack.c.bf16 %v486, %v484
      %v491 = vld [vmem:[%s5] sm:$0x3]
      %v492 = vld [vmem:[%s6] sm:$0xf]
      %494 = vset.pattern.permute.xlu0 0
      %495 = vperm.xlu0 %494, %v492
      %v496 = vpop.permute.xlu0 %495
      %vm498 = vcmask 261120
      %v500 = vsel %vm498, %v491, 0
      %502 = vmatprep.subr.bf16.mxu0 0
      %503 = vmatpush1.bf16.msra.mxu0 0
      %504 = vmatprep.subr.bf16.mxu0 0
      %505 = vmatpush1.bf16.msra.mxu0 0
      %506 = vmatprep.subr.bf16.mxu0 0
      %507 = vmatpush1.bf16.msra.mxu0 0
      %508 = vmatprep.subr.bf16.mxu0 0
      %509 = vmatpush1.bf16.msra.mxu0 0
      %510 = vmatprep.subr.bf16.mxu0 0
      %511 = vmatpush1.bf16.msra.mxu0 0
      %512 = vmatprep.subr.bf16.mxu0 0
      %513 = vmatpush1.bf16.msra.mxu0 0
      %514 = vmatprep.subr.bf16.mxu0 %v490
      %515 = vmatpush1.bf16.msra.mxu0 %v489
      %516 = vmatprep.subr.bf16.mxu0 %v488
      %517 = vmatpush1.bf16.msra.mxu0 %v487
      %518 = vmatprep.subr.bf16.mxu0 0
      %519 = vmatpush2.bf16.msra.mxu0 0
      %520 = vmatprep.subr.bf16.mxu0 0
      %521 = vmatpush2.bf16.msra.mxu0 0
      %522 = vmatprep.subr.bf16.mxu0 0
      %523 = vmatpush2.bf16.msra.mxu0 0
      %524 = vmatprep.subr.bf16.mxu0 0
      %525 = vmatpush2.bf16.msra.mxu0 0
      %526 = vmatprep.subr.bf16.mxu0 0
      %527 = vmatpush2.bf16.msra.mxu0 0
      %528 = vmatprep.subr.bf16.mxu0 0
      %529 = vmatpush2.bf16.msra.mxu0 0
      %530 = vmatprep.subr.bf16.mxu0 0
      %531 = vmatpush2.bf16.msra.mxu0 0
      %532 = vmatprep.subr.bf16.mxu0 0
      %533 = vmatpush2.bf16.msra.mxu0 0
      %534 = vmatprep.mubr.bf16.mxu0 0
      %535 = vmatmul.mubr.bf16.gmra.mxu0 %v500
      %v536 = vpop.f32.mrf.mxu0
      %v537 = vadd.f32 %v496, %v536
      %v538 = vpop.f32.mrf.mxu0
      %v539 = vadd.f32 %v496, %v538
      %v540 = vpop.f32.mrf.mxu0
      %v541 = vpop.f32.mrf.mxu0
      %542 = vdwg.mxu0
      %v543 = vstv %s351
      %v544 = vmul.f32 %v543, %v366
      %v545 = vstv %s353
      %v546 = vmul.f32 %v545, %v537
      %v547 = vmul.f32 %v545, %v539
      %v550 = vcombine.low %v546, %v547
      %v552 = vadd.f32 %v544, %v550
      %v553 = vsub.f32 %v363, %v552
      %v554 = vld [vmem:[%s340] sm:$0xf]
      %v555 = vmul.f32 %v553, %v553
      %v557 = vcombine.high %v555, %v555
      %vm559 = vcmask 1043456
      %v560 = vsel %vm559, %v555, 0.0
      %v561 = vsel %vm559, %v557, 0.0
      %v562 = vadd.f32 %v560, %v561
      %563 = vadd.xlane.f32.xlu0 %v562
      %v564 = vpop.xlane.xlu0 %563
      %v565 = vstv %s357
      %v566 = vmul.f32 %v565, %v564
      %v567 = vadd.f32 %v554, %v566
      %vm568 = vcmask 3072
      %569 = vst.msk [vmem:[%s340] sm:$0xf] %vm568, %v567
      %p570 = scmp.lt.s32.totalorder %s28, 1
      %s571 = scalar_select %p570, %s28, 1
      %s572 = smul.addr %s571, 4
      %s573 = scalar_lea.vmem %s7, %s572
      // Predicated region
      $region49: #{tpu_custom_call.1} parent=43 // pred_check
        %p574 = pneg %p199
      $region50: #{tpu_custom_call.1} parent=43 // pred_check_branch
        %576 = sbr.rel (%p574) target = $region52
      $region51: #{tpu_custom_call.1} parent=43 // pred_region
        _
      $region52: #{tpu_custom_call.1} parent=43 // pred_fallthru
        _
    $region44: #{tpu_custom_call.1} parent=5 // pred_fallthru
      _
    %p577 = scmp.le.s32.totalorder 2, %s19
    // Predicated region
    $region53: #{tpu_custom_call.1} parent=5 // pred_check
      %p578 = pneg %p577
    $region54: #{tpu_custom_call.1} parent=5 // pred_check_branch
      %580 = sbr.rel (%p578) target = $region56
    $region55: #{tpu_custom_call.1} parent=5 // pred_region
      %s581 = ssub.s32 %s19, 2
      // Predicated region
      $region57: #{tpu_custom_call.1} parent=55 // pred_check
        %p582 = pneg %p205
      $region58: #{tpu_custom_call.1} parent=55 // pred_check_branch
        %584 = sbr.rel (%p582) target = $region60
      $region59: #{tpu_custom_call.1} parent=55 // pred_region
        %p585 = scmp.lt.s32.totalorder %s30, 1
        %s586 = scalar_select %p585, %s30, 1
        %s587 = smul.addr %s586, 4
        %s588 = scalar_lea.vmem %s7, %s587
      $region60: #{tpu_custom_call.1} parent=55 // pred_fallthru
        _
    $region56: #{tpu_custom_call.1} parent=5 // pred_fallthru
      _
  $region6: #{tpu_custom_call.1} parent=0 // loop_footer
    %s23 = sadd.s32 1, %s19
  $region7: #{tpu_custom_call.1} parent=0 // loop_footer_branch
    %18 = sbr.rel target = $region3
  $region8: #{tpu_custom_call.1} parent=0 // loop_exit
    _

</llo_original>
